<compile_context>
chip_gen: v5e
topology: v5e:2x2
jax: 0.10.0
libtpu: 0.0.40
codegen_flags: <defaults>
</compile_context>

<pallas_src>
import jax
import jax.numpy as jnp
import numpy as np
from jax import lax
from jax.experimental import pallas as pl
from jax.experimental.pallas import tpu as pltpu


def span_scores_pallas(hidden, seq_lens, params, max_span):
    """Returns (scores [B,S,M] f32, span embeddings [B,S,M,H] bf16) for span
    (start=s, length=l+1), end clamped to seq_len-1."""
    B, S, H = hidden.shape
    M = int(max_span)
    wterm, W1, b1, W2, b2, Ws, bs = params
    assert W1.shape == (H, 64) and W2.shape == (64, 1)

    # ---- parameter prep: fold termWeight into W1, append Ws as column 64 ----
    W1p = wterm.reshape(H, 1).astype(jnp.float32) * W1.astype(jnp.float32)   # (H,64)
    W1aug = jnp.concatenate(
        [W1p,
         Ws.reshape(H, 1).astype(jnp.float32),
         jnp.zeros((H, 128 - 65), jnp.float32)], axis=1).astype(jnp.bfloat16)  # (H,128)
    b1_2 = b1.reshape(1, 64).astype(jnp.float32)
    w2row = W2.reshape(1, 64).astype(jnp.float32)      # Linear(64,1) as VPU reduction
    b2_2 = b2.reshape(1, 1).astype(jnp.float32)
    bs2 = bs.reshape(1, 1).astype(jnp.float32)

    # ---- tiling decisions (static) ----
    stream_emb = (H % 128 == 0)                        # aligned per-l slab stores
    if stream_emb and S % 256 == 0 and S > 256:
        tS = 256
    elif stream_emb and S % 128 == 0 and S > 128:
        tS = 128
    else:
        tS = S
    nS = S // tS
    PADM = 0 if M <= 1 else ((M - 1 + 7) // 8) * 8     # sublane-aligned halo rows
    S_pad = S + PADM
    tSx = tS + PADM

    # bf16 ingest (halves the HBM read); pad so shifted reads never go OOB.
    h_in = hidden.astype(jnp.bfloat16)
    if PADM:
        h_in = jnp.pad(h_in, ((0, 0), (0, PADM), (0, 0)))
    seq_lens = seq_lens.astype(jnp.int32)

    def kernel(seqlen_ref,              # scalar prefetch (SMEM): (B,) int32
               h_ref,                   # (1, S_pad, H)  bf16  (resident per batch)
               w1aug_ref,               # (H, 128)       bf16  [wterm*W1 | Ws | 0]
               b1_ref,                  # (1, 64)        f32
               w2_ref,                  # (1, 64)        f32
               b2_ref,                  # (1, 1)         f32
               bs_ref,                  # (1, 1)         f32
               score_ref,               # out (1, M, tS)      f32  (lane-dense)
               emb_ref):                # out (1, tS, M*H)    bf16 (lane-dense slab)
        b = pl.program_id(0)
        j = pl.program_id(1)
        L = seqlen_ref[b]
        row0 = pl.multiple_of(j * tS, tS) if nS > 1 else 0

        he = h_ref[0, pl.ds(row0, tSx), :]                       # (tSx, H) bf16
        he32 = he.astype(jnp.float32)

        # One MXU pass gives attention-logit features (lanes 0..63) and the
        # per-token spanEmb2Score contribution hs (lane 64).
        z = jnp.dot(he, w1aug_ref[...], preferred_element_type=jnp.float32)
        z1 = jnp.maximum(z[:, :64] + b1_ref[...], 0.0)
        logit = jnp.sum(z1 * w2_ref[...], axis=1, keepdims=True) + b2_ref[...]  # (tSx,1)
        hs = z[:, 64:65]                                                         # (tSx,1)

        s_idx = row0 + lax.broadcasted_iota(jnp.int32, (tS, 1), 0)   # global start idx

        # ---- incremental online-softmax over span length ----
        # span(s, l) covers tokens [s, min(s+l, L-1)]; for s >= L it is just {s}.
        m_run = logit[:tS]
        denom = jnp.ones((tS, 1), jnp.float32)
        numer = he32[:tS]
        num_sc = hs[:tS]
        score_cols = [hs[:tS]]                 # l == 0: exact, no normalization
        slabs = []
        if stream_emb:
            emb_ref[0, :, 0:H] = he[:tS]       # l == 0 slab is h itself (bf16)
        else:
            slabs.append(he[:tS])

        for l in range(1, M):                  # M is small & static -> unrolled
            add = (s_idx + l) < L
            logit_l = logit[l:l + tS]
            m_new = jnp.where(add, jnp.maximum(m_run, logit_l), m_run)
            scale = jnp.exp(m_run - m_new)                    # == 1 where not added
            w = jnp.exp(jnp.where(add, logit_l - m_new, -1e30))  # == 0 where not added
            numer = numer * scale + w * he32[l:l + tS]
            denom = denom * scale + w
            num_sc = num_sc * scale + w * hs[l:l + tS]
            m_run = m_new

            inv_d = pl.reciprocal(denom, approx=True)         # EUP slot (emb path)
            slab = (numer * inv_d).astype(emb_ref.dtype)
            if stream_emb:
                emb_ref[0, :, l * H:(l + 1) * H] = slab       # streamed, lane-aligned
            else:
                slabs.append(slab)
            score_cols.append(num_sc / denom)                 # exact divide for scores

        if not stream_emb:
            emb_ref[0] = jnp.concatenate(slabs, axis=-1)      # fallback (H % 128 != 0)
        score_mat = jnp.concatenate(score_cols, axis=1) + bs_ref[...]   # (tS, M)
        score_ref[0] = jnp.transpose(score_mat)                          # one relayout

    # ---- explicit VMEM budget (double-buffered blocks + in-kernel temps) ----
    bf16_b, f32_b = 2, 4
    h_blk = S_pad * H * bf16_b
    emb_blk = tS * M * H * bf16_b
    score_blk = M * tS * f32_b
    param_blk = H * 128 * bf16_b + (64 + 64 + 1 + 1) * f32_b
    temps = (tSx * H * (bf16_b + f32_b)      # he + he32
             + tSx * 128 * f32_b             # z
             + 3 * tS * H * f32_b            # numer / shifted copy / slab temp
             + 16 * tS * f32_b)              # (tS,1) state vectors
    est = 2 * (h_blk + emb_blk + score_blk + param_blk) + temps
    vmem_limit = int(min(48 * 2**20, max(32 * 2**20, (3 * est) // 2)))

    grid_spec = pltpu.PrefetchScalarGridSpec(
        num_scalar_prefetch=1,
        grid=(B, nS),
        in_specs=[
            pl.BlockSpec((1, S_pad, H), lambda b, j, sl: (b, 0, 0)),   # resident over j
            pl.BlockSpec((H, 128), lambda b, j, sl: (0, 0)),
            pl.BlockSpec((1, 64), lambda b, j, sl: (0, 0)),
            pl.BlockSpec((1, 64), lambda b, j, sl: (0, 0)),
            pl.BlockSpec((1, 1), lambda b, j, sl: (0, 0)),
            pl.BlockSpec((1, 1), lambda b, j, sl: (0, 0)),
        ],
        out_specs=[
            pl.BlockSpec((1, M, tS), lambda b, j, sl: (b, 0, j)),
            pl.BlockSpec((1, tS, M * H), lambda b, j, sl: (b, j, 0)),
        ],
    )

    score_ms, emb_flat = pl.pallas_call(
        kernel,
        grid_spec=grid_spec,
        out_shape=(jax.ShapeDtypeStruct((B, M, S), jnp.float32),
                   jax.ShapeDtypeStruct((B, S, M * H), jnp.bfloat16)),
        compiler_params=pltpu.CompilerParams(
            dimension_semantics=("parallel", "parallel"),
            vmem_limit_bytes=vmem_limit),
    )(seq_lens, h_in, W1aug, b1_2, w2row, b2_2, bs2)

    scores = jnp.transpose(score_ms, (0, 2, 1))        # (B, S, M)
    embs = emb_flat.reshape(B, S, M, H)                # (B, S, M, H) bf16
    return scores, embs


def reference(hidden, seq_lens, params, max_span):
    """Pure numpy re-implementation of TermAttention + spanEmb2Score per span."""
    wterm, W1, b1, W2, b2, Ws, bs = [np.asarray(p, np.float32) for p in params]
    h = np.asarray(hidden, np.float32)
    seq_lens = np.asarray(seq_lens)
    B, S, H = h.shape
    M = max_span
    scores = np.zeros((B, S, M), np.float32)
    embs = np.zeros((B, S, M, H), np.float32)
    for b in range(B):
        L = int(seq_lens[b])
        for s in range(S):
            for l in range(M):
                if s < L:
                    e = min(s + l, L - 1) + 1
                    span = h[b, s:e]
                else:
                    span = h[b, s:s + 1]          # padded start; kernel fallback
                ah = span * wterm
                z1 = np.maximum(ah @ W1 + b1, 0.0)
                logit = z1 @ W2 + b2               # (len, 1)
                a = np.exp(logit - logit.max())
                a = a / a.sum()
                emb = (span * a).sum(axis=0)
                embs[b, s, l] = emb
                scores[b, s, l] = emb @ Ws + bs[0]
    return scores, embs


if __name__ == "__main__":
    # H is a multiple of 128 so the streamed (lane-aligned) slab-store path is
    # the one exercised on TPU; other shapes stay small.
    B, S, H, MAX_SPAN = 2, 16, 128, 4

    key = jax.random.PRNGKey(0)
    ks = jax.random.split(key, 8)
    # TermAttention params: termWeight, Linear(H,64), Linear(64,1)
    wterm = jax.random.normal(ks[0], (H,), jnp.float32)
    W1 = 0.1 * jax.random.normal(ks[1], (H, 64), jnp.float32)
    b1 = 0.1 * jax.random.normal(ks[2], (64,), jnp.float32)
    W2 = 0.1 * jax.random.normal(ks[3], (64, 1), jnp.float32)
    b2 = 0.1 * jax.random.normal(ks[4], (1,), jnp.float32)
    # spanEmb2Score: Linear(H, 1)
    Ws = 0.1 * jax.random.normal(ks[5], (H,), jnp.float32)
    bs = 0.1 * jax.random.normal(ks[6], (1,), jnp.float32)
    params = (wterm, W1, b1, W2, b2, Ws, bs)

    # TODO(synk): WordSequence encoder is not provided; hidden_features are a
    # direct input here (fed in bf16, the encoder's native dtype). Top-k span
    # selection / precision-recall / loss are host-side data-dependent python
    # and stay outside the kernel.
    hidden = jax.random.normal(ks[7], (B, S, H), jnp.float32)
    hidden_bf = hidden.astype(jnp.bfloat16)        # kernel ingests bf16 hidden
    seq_lens = jnp.array([S, S - 3], dtype=jnp.int32)

    scores, embs = jax.block_until_ready(
        span_scores_pallas(hidden_bf, seq_lens, params, MAX_SPAN))

    # Reference evaluated on the same bf16-quantized hidden the kernel ingests;
    # tolerances cover bf16 MXU operands, bf16 emb output and the approximate
    # reciprocal on the embedding-normalization path.
    ref_scores, ref_embs = reference(np.asarray(hidden_bf.astype(jnp.float32)),
                                     seq_lens, params, MAX_SPAN)
    np.testing.assert_allclose(np.asarray(scores), ref_scores, rtol=2e-2, atol=2e-2)
    np.testing.assert_allclose(np.asarray(embs.astype(jnp.float32)), ref_embs,
                               rtol=2e-2, atol=2e-2)
    print("KERNEL_OK")
</pallas_src>

<mosaic_0001>
module attributes {stable_mosaic.version = 11 : i64} {
  func.func @kernel(%arg0: i32, %arg1: i32, %arg2: memref<2xi32, #tpu.memory_space<smem>>, %arg3: memref<1x24x128xbf16, #tpu.memory_space<vmem>>, %arg4: memref<128x128xbf16, #tpu.memory_space<vmem>>, %arg5: memref<1x64xf32, #tpu.memory_space<vmem>>, %arg6: memref<1x64xf32, #tpu.memory_space<vmem>>, %arg7: memref<1x1xf32, #tpu.memory_space<vmem>>, %arg8: memref<1x1xf32, #tpu.memory_space<vmem>>, %arg9: memref<1x4x16xf32, #tpu.memory_space<vmem>>, %arg10: memref<1x16x512xbf16, #tpu.memory_space<vmem>>) attributes {dimension_semantics = [#tpu.dimension_semantics<parallel>, #tpu.dimension_semantics<parallel>], iteration_bounds = array<i64: 2, 1>, scalar_prefetch = 1 : i64, scratch_operands = 0 : i64, tpu.core_type = #tpu.core_type<tc>, window_params = [{transform_indices = @transform_0, window_bounds = array<i64: 1, 24, 128>}, {pipeline_mode = #tpu.pipeline_mode<synchronous>, transform_indices = @transform_1, window_bounds = array<i64: 128, 128>}, {pipeline_mode = #tpu.pipeline_mode<synchronous>, transform_indices = @transform_2, window_bounds = array<i64: 1, 64>}, {pipeline_mode = #tpu.pipeline_mode<synchronous>, transform_indices = @transform_3, window_bounds = array<i64: 1, 64>}, {pipeline_mode = #tpu.pipeline_mode<synchronous>, transform_indices = @transform_4, window_bounds = array<i64: 1, 1>}, {pipeline_mode = #tpu.pipeline_mode<synchronous>, transform_indices = @transform_5, window_bounds = array<i64: 1, 1>}, {transform_indices = @transform_6, window_bounds = array<i64: 1, 4, 16>}, {transform_indices = @transform_7, window_bounds = array<i64: 1, 16, 512>}]} {
    %0 = arith.index_cast %arg0 : i32 to index
    %1 = memref.load %arg2[%0] : memref<2xi32, #tpu.memory_space<smem>>
    %c0 = arith.constant 0 : index
    %c0_0 = arith.constant 0 : index
    %c0_1 = arith.constant 0 : index
    %2 = vector.load %arg3[%c0, %c0_0, %c0_1] : memref<1x24x128xbf16, #tpu.memory_space<vmem>>, vector<1x24x128xbf16>
    %3 = vector.shape_cast %2 : vector<1x24x128xbf16> to vector<24x128xbf16>
    %4 = arith.extf %3 : vector<24x128xbf16> to vector<24x128xf32>
    %c0_2 = arith.constant 0 : index
    %c0_3 = arith.constant 0 : index
    %5 = vector.load %arg4[%c0_2, %c0_3] : memref<128x128xbf16, #tpu.memory_space<vmem>>, vector<128x128xbf16>
    %cst = arith.constant dense<0.000000e+00> : vector<24x128xf32>
    %6 = tpu.matmul %3, %5, %cst {dimension_numbers = #tpu.dot_dimension_numbers<[1], [0], [0], [1], [0, 0, 1, 1], [], []>} : vector<24x128xbf16>, vector<128x128xbf16>, vector<24x128xf32> -> vector<24x128xf32>
    %7 = vector.extract_strided_slice %6 {offsets = [0, 0], sizes = [24, 64], strides = [1, 1]} : vector<24x128xf32> to vector<24x64xf32>
    %c0_4 = arith.constant 0 : index
    %c0_5 = arith.constant 0 : index
    %8 = vector.load %arg5[%c0_4, %c0_5] : memref<1x64xf32, #tpu.memory_space<vmem>>, vector<1x64xf32>
    %9 = vector.broadcast %8 : vector<1x64xf32> to vector<24x64xf32>
    %10 = arith.addf %7, %9 : vector<24x64xf32>
    %cst_6 = arith.constant 0.000000e+00 : f32
    %11 = vector.broadcast %cst_6 : f32 to vector<24x64xf32>
    %12 = arith.maximumf %10, %11 : vector<24x64xf32>
    %c0_7 = arith.constant 0 : index
    %c0_8 = arith.constant 0 : index
    %13 = vector.load %arg6[%c0_7, %c0_8] : memref<1x64xf32, #tpu.memory_space<vmem>>, vector<1x64xf32>
    %14 = vector.broadcast %13 : vector<1x64xf32> to vector<24x64xf32>
    %15 = arith.mulf %12, %14 : vector<24x64xf32>
    %cst_9 = arith.constant dense<0.000000e+00> : vector<24xf32>
    %16 = vector.multi_reduction <add>, %15, %cst_9 [1] : vector<24x64xf32> to vector<24xf32>
    %17 = vector.shape_cast %16 : vector<24xf32> to vector<24x1xf32>
    %c0_10 = arith.constant 0 : index
    %c0_11 = arith.constant 0 : index
    %18 = vector.load %arg7[%c0_10, %c0_11] : memref<1x1xf32, #tpu.memory_space<vmem>>, vector<1x1xf32>
    %19 = vector.broadcast %18 : vector<1x1xf32> to vector<24x1xf32>
    %20 = arith.addf %17, %19 : vector<24x1xf32>
    %21 = vector.extract_strided_slice %6 {offsets = [0, 64], sizes = [24, 1], strides = [1, 1]} : vector<24x128xf32> to vector<24x1xf32>
    %22 = tpu.iota {dimensions = array<i32: 0>} : vector<16x1xi32>
    %c0_i32 = arith.constant 0 : i32
    %23 = vector.broadcast %c0_i32 : i32 to vector<16x1xi32>
    %24 = arith.addi %23, %22 : vector<16x1xi32>
    %25 = vector.extract_strided_slice %20 {offsets = [0, 0], sizes = [16, 1], strides = [1, 1]} : vector<24x1xf32> to vector<16x1xf32>
    %cst_12 = arith.constant 1.000000e+00 : f32
    %26 = vector.broadcast %cst_12 : f32 to vector<16x1xf32>
    %27 = vector.extract_strided_slice %4 {offsets = [0, 0], sizes = [16, 128], strides = [1, 1]} : vector<24x128xf32> to vector<16x128xf32>
    %28 = vector.extract_strided_slice %21 {offsets = [0, 0], sizes = [16, 1], strides = [1, 1]} : vector<24x1xf32> to vector<16x1xf32>
    %29 = vector.extract_strided_slice %21 {offsets = [0, 0], sizes = [16, 1], strides = [1, 1]} : vector<24x1xf32> to vector<16x1xf32>
    %30 = vector.extract_strided_slice %3 {offsets = [0, 0], sizes = [16, 128], strides = [1, 1]} : vector<24x128xbf16> to vector<16x128xbf16>
    %c0_13 = arith.constant 0 : index
    %c0_14 = arith.constant 0 : index
    %c0_15 = arith.constant 0 : index
    %31 = vector.load %arg10[%c0_13, %c0_14, %c0_15] : memref<1x16x512xbf16, #tpu.memory_space<vmem>>, vector<1x16x128xbf16>
    %32 = vector.shape_cast %31 : vector<1x16x128xbf16> to vector<16x128xbf16>
    %33 = vector.shape_cast %30 : vector<16x128xbf16> to vector<1x16x128xbf16>
    tpu.vector_store %arg10[%c0_13, %c0_14, %c0_15], %33 {strides = array<i32>} : memref<1x16x512xbf16, #tpu.memory_space<vmem>>, vector<1x16x128xbf16>,
    %c1_i32 = arith.constant 1 : i32
    %34 = vector.broadcast %c1_i32 : i32 to vector<16x1xi32>
    %35 = arith.addi %24, %34 : vector<16x1xi32>
    %36 = vector.broadcast %1 : i32 to vector<16x1xi32>
    %37 = arith.cmpi slt, %35, %36 : vector<16x1xi32>
    %38 = vector.extract_strided_slice %20 {offsets = [1, 0], sizes = [16, 1], strides = [1, 1]} : vector<24x1xf32> to vector<16x1xf32>
    %39 = arith.maximumf %25, %38 : vector<16x1xf32>
    %40 = arith.select %37, %39, %25 : vector<16x1xi1>, vector<16x1xf32>
    %41 = arith.subf %25, %40 : vector<16x1xf32>
    %42 = math.exp %41 : vector<16x1xf32>
    %43 = arith.subf %38, %40 : vector<16x1xf32>
    %cst_16 = arith.constant -1.000000e+30 : f32
    %44 = vector.broadcast %cst_16 : f32 to vector<16x1xf32>
    %45 = arith.select %37, %43, %44 : vector<16x1xi1>, vector<16x1xf32>
    %46 = math.exp %45 : vector<16x1xf32>
    %47 = vector.broadcast %42 : vector<16x1xf32> to vector<16x128xf32>
    %48 = arith.mulf %27, %47 : vector<16x128xf32>
    %49 = vector.extract_strided_slice %4 {offsets = [1, 0], sizes = [16, 128], strides = [1, 1]} : vector<24x128xf32> to vector<16x128xf32>
    %50 = vector.broadcast %46 : vector<16x1xf32> to vector<16x128xf32>
    %51 = arith.mulf %50, %49 : vector<16x128xf32>
    %52 = arith.addf %48, %51 : vector<16x128xf32>
    %53 = arith.mulf %26, %42 : vector<16x1xf32>
    %54 = arith.addf %53, %46 : vector<16x1xf32>
    %55 = arith.mulf %28, %42 : vector<16x1xf32>
    %56 = vector.extract_strided_slice %21 {offsets = [1, 0], sizes = [16, 1], strides = [1, 1]} : vector<24x1xf32> to vector<16x1xf32>
    %57 = arith.mulf %46, %56 : vector<16x1xf32>
    %58 = arith.addf %55, %57 : vector<16x1xf32>
    %59 = tpu.reciprocal %54 {approx = true} : vector<16x1xf32> -> vector<16x1xf32>
    %60 = vector.broadcast %59 : vector<16x1xf32> to vector<16x128xf32>
    %61 = arith.mulf %52, %60 : vector<16x128xf32>
    %62 = arith.truncf %61 : vector<16x128xf32> to vector<16x128xbf16>
    %c0_17 = arith.constant 0 : index
    %c0_18 = arith.constant 0 : index
    %c128 = arith.constant 128 : index
    %63 = vector.load %arg10[%c0_17, %c0_18, %c128] : memref<1x16x512xbf16, #tpu.memory_space<vmem>>, vector<1x16x128xbf16>
    %64 = vector.shape_cast %63 : vector<1x16x128xbf16> to vector<16x128xbf16>
    %65 = vector.shape_cast %62 : vector<16x128xbf16> to vector<1x16x128xbf16>
    tpu.vector_store %arg10[%c0_17, %c0_18, %c128], %65 {strides = array<i32>} : memref<1x16x512xbf16, #tpu.memory_space<vmem>>, vector<1x16x128xbf16>,
    %66 = arith.divf %58, %54 : vector<16x1xf32>
    %c2_i32 = arith.constant 2 : i32
    %67 = vector.broadcast %c2_i32 : i32 to vector<16x1xi32>
    %68 = arith.addi %24, %67 : vector<16x1xi32>
    %69 = vector.broadcast %1 : i32 to vector<16x1xi32>
    %70 = arith.cmpi slt, %68, %69 : vector<16x1xi32>
    %71 = vector.extract_strided_slice %20 {offsets = [2, 0], sizes = [16, 1], strides = [1, 1]} : vector<24x1xf32> to vector<16x1xf32>
    %72 = arith.maximumf %40, %71 : vector<16x1xf32>
    %73 = arith.select %70, %72, %40 : vector<16x1xi1>, vector<16x1xf32>
    %74 = arith.subf %40, %73 : vector<16x1xf32>
    %75 = math.exp %74 : vector<16x1xf32>
    %76 = arith.subf %71, %73 : vector<16x1xf32>
    %cst_19 = arith.constant -1.000000e+30 : f32
    %77 = vector.broadcast %cst_19 : f32 to vector<16x1xf32>
    %78 = arith.select %70, %76, %77 : vector<16x1xi1>, vector<16x1xf32>
    %79 = math.exp %78 : vector<16x1xf32>
    %80 = vector.broadcast %75 : vector<16x1xf32> to vector<16x128xf32>
    %81 = arith.mulf %52, %80 : vector<16x128xf32>
    %82 = vector.extract_strided_slice %4 {offsets = [2, 0], sizes = [16, 128], strides = [1, 1]} : vector<24x128xf32> to vector<16x128xf32>
    %83 = vector.broadcast %79 : vector<16x1xf32> to vector<16x128xf32>
    %84 = arith.mulf %83, %82 : vector<16x128xf32>
    %85 = arith.addf %81, %84 : vector<16x128xf32>
    %86 = arith.mulf %54, %75 : vector<16x1xf32>
    %87 = arith.addf %86, %79 : vector<16x1xf32>
    %88 = arith.mulf %58, %75 : vector<16x1xf32>
    %89 = vector.extract_strided_slice %21 {offsets = [2, 0], sizes = [16, 1], strides = [1, 1]} : vector<24x1xf32> to vector<16x1xf32>
    %90 = arith.mulf %79, %89 : vector<16x1xf32>
    %91 = arith.addf %88, %90 : vector<16x1xf32>
    %92 = tpu.reciprocal %87 {approx = true} : vector<16x1xf32> -> vector<16x1xf32>
    %93 = vector.broadcast %92 : vector<16x1xf32> to vector<16x128xf32>
    %94 = arith.mulf %85, %93 : vector<16x128xf32>
    %95 = arith.truncf %94 : vector<16x128xf32> to vector<16x128xbf16>
    %c0_20 = arith.constant 0 : index
    %c0_21 = arith.constant 0 : index
    %c256 = arith.constant 256 : index
    %96 = vector.load %arg10[%c0_20, %c0_21, %c256] : memref<1x16x512xbf16, #tpu.memory_space<vmem>>, vector<1x16x128xbf16>
    %97 = vector.shape_cast %96 : vector<1x16x128xbf16> to vector<16x128xbf16>
    %98 = vector.shape_cast %95 : vector<16x128xbf16> to vector<1x16x128xbf16>
    tpu.vector_store %arg10[%c0_20, %c0_21, %c256], %98 {strides = array<i32>} : memref<1x16x512xbf16, #tpu.memory_space<vmem>>, vector<1x16x128xbf16>,
    %99 = arith.divf %91, %87 : vector<16x1xf32>
    %c3_i32 = arith.constant 3 : i32
    %100 = vector.broadcast %c3_i32 : i32 to vector<16x1xi32>
    %101 = arith.addi %24, %100 : vector<16x1xi32>
    %102 = vector.broadcast %1 : i32 to vector<16x1xi32>
    %103 = arith.cmpi slt, %101, %102 : vector<16x1xi32>
    %104 = vector.extract_strided_slice %20 {offsets = [3, 0], sizes = [16, 1], strides = [1, 1]} : vector<24x1xf32> to vector<16x1xf32>
    %105 = arith.maximumf %73, %104 : vector<16x1xf32>
    %106 = arith.select %103, %105, %73 : vector<16x1xi1>, vector<16x1xf32>
    %107 = arith.subf %73, %106 : vector<16x1xf32>
    %108 = math.exp %107 : vector<16x1xf32>
    %109 = arith.subf %104, %106 : vector<16x1xf32>
    %cst_22 = arith.constant -1.000000e+30 : f32
    %110 = vector.broadcast %cst_22 : f32 to vector<16x1xf32>
    %111 = arith.select %103, %109, %110 : vector<16x1xi1>, vector<16x1xf32>
    %112 = math.exp %111 : vector<16x1xf32>
    %113 = vector.broadcast %108 : vector<16x1xf32> to vector<16x128xf32>
    %114 = arith.mulf %85, %113 : vector<16x128xf32>
    %115 = vector.extract_strided_slice %4 {offsets = [3, 0], sizes = [16, 128], strides = [1, 1]} : vector<24x128xf32> to vector<16x128xf32>
    %116 = vector.broadcast %112 : vector<16x1xf32> to vector<16x128xf32>
    %117 = arith.mulf %116, %115 : vector<16x128xf32>
    %118 = arith.addf %114, %117 : vector<16x128xf32>
    %119 = arith.mulf %87, %108 : vector<16x1xf32>
    %120 = arith.addf %119, %112 : vector<16x1xf32>
    %121 = arith.mulf %91, %108 : vector<16x1xf32>
    %122 = vector.extract_strided_slice %21 {offsets = [3, 0], sizes = [16, 1], strides = [1, 1]} : vector<24x1xf32> to vector<16x1xf32>
    %123 = arith.mulf %112, %122 : vector<16x1xf32>
    %124 = arith.addf %121, %123 : vector<16x1xf32>
    %125 = tpu.reciprocal %120 {approx = true} : vector<16x1xf32> -> vector<16x1xf32>
    %126 = vector.broadcast %125 : vector<16x1xf32> to vector<16x128xf32>
    %127 = arith.mulf %118, %126 : vector<16x128xf32>
    %128 = arith.truncf %127 : vector<16x128xf32> to vector<16x128xbf16>
    %c0_23 = arith.constant 0 : index
    %c0_24 = arith.constant 0 : index
    %c384 = arith.constant 384 : index
    %129 = vector.load %arg10[%c0_23, %c0_24, %c384] : memref<1x16x512xbf16, #tpu.memory_space<vmem>>, vector<1x16x128xbf16>
    %130 = vector.shape_cast %129 : vector<1x16x128xbf16> to vector<16x128xbf16>
    %131 = vector.shape_cast %128 : vector<16x128xbf16> to vector<1x16x128xbf16>
    tpu.vector_store %arg10[%c0_23, %c0_24, %c384], %131 {strides = array<i32>} : memref<1x16x512xbf16, #tpu.memory_space<vmem>>, vector<1x16x128xbf16>,
    %132 = arith.divf %124, %120 : vector<16x1xf32>
    %133 = tpu.concatenate %29, %66, %99, %132 in 1 : vector<16x1xf32>, vector<16x1xf32>, vector<16x1xf32>, vector<16x1xf32> -> vector<16x4xf32>
    %c0_25 = arith.constant 0 : index
    %c0_26 = arith.constant 0 : index
    %134 = vector.load %arg8[%c0_25, %c0_26] : memref<1x1xf32, #tpu.memory_space<vmem>>, vector<1x1xf32>
    %135 = vector.broadcast %134 : vector<1x1xf32> to vector<16x4xf32>
    %136 = arith.addf %133, %135 : vector<16x4xf32>
    %137 = tpu.transpose %136, [1, 0] : vector<16x4xf32> -> vector<4x16xf32>
    %c0_27 = arith.constant 0 : index
    %c0_28 = arith.constant 0 : index
    %c0_29 = arith.constant 0 : index
    %138 = vector.load %arg9[%c0_27, %c0_28, %c0_29] : memref<1x4x16xf32, #tpu.memory_space<vmem>>, vector<1x4x16xf32>
    %139 = vector.shape_cast %138 : vector<1x4x16xf32> to vector<4x16xf32>
    %140 = vector.shape_cast %137 : vector<4x16xf32> to vector<1x4x16xf32>
    tpu.vector_store %arg9[%c0_27, %c0_28, %c0_29], %140 {strides = array<i32>} : memref<1x4x16xf32, #tpu.memory_space<vmem>>, vector<1x4x16xf32>,
    return
  }
  func.func @transform_0(%arg0: i32, %arg1: i32, %arg2: memref<2xi32, #tpu.memory_space<smem>>) -> (i32, i32, i32) {
    %c0_i32 = arith.constant 0 : i32
    %c0_i32_0 = arith.constant 0 : i32
    %c0_i32_1 = arith.constant 0 : i32
    return %arg0, %c0_i32, %c0_i32_0 : i32, i32, i32
  }
  func.func @transform_1(%arg0: i32, %arg1: i32, %arg2: memref<2xi32, #tpu.memory_space<smem>>) -> (i32, i32) {
    %c0_i32 = arith.constant 0 : i32
    %c0_i32_0 = arith.constant 0 : i32
    %c0_i32_1 = arith.constant 0 : i32
    return %c0_i32, %c0_i32_0 : i32, i32
  }
  func.func @transform_2(%arg0: i32, %arg1: i32, %arg2: memref<2xi32, #tpu.memory_space<smem>>) -> (i32, i32) {
    %c0_i32 = arith.constant 0 : i32
    %c0_i32_0 = arith.constant 0 : i32
    %c0_i32_1 = arith.constant 0 : i32
    return %c0_i32, %c0_i32_0 : i32, i32
  }
  func.func @transform_3(%arg0: i32, %arg1: i32, %arg2: memref<2xi32, #tpu.memory_space<smem>>) -> (i32, i32) {
    %c0_i32 = arith.constant 0 : i32
    %c0_i32_0 = arith.constant 0 : i32
    %c0_i32_1 = arith.constant 0 : i32
    return %c0_i32, %c0_i32_0 : i32, i32
  }
  func.func @transform_4(%arg0: i32, %arg1: i32, %arg2: memref<2xi32, #tpu.memory_space<smem>>) -> (i32, i32) {
    %c0_i32 = arith.constant 0 : i32
    %c0_i32_0 = arith.constant 0 : i32
    %c0_i32_1 = arith.constant 0 : i32
    return %c0_i32, %c0_i32_0 : i32, i32
  }
  func.func @transform_5(%arg0: i32, %arg1: i32, %arg2: memref<2xi32, #tpu.memory_space<smem>>) -> (i32, i32) {
    %c0_i32 = arith.constant 0 : i32
    %c0_i32_0 = arith.constant 0 : i32
    %c0_i32_1 = arith.constant 0 : i32
    return %c0_i32, %c0_i32_0 : i32, i32
  }
  func.func @transform_6(%arg0: i32, %arg1: i32, %arg2: memref<2xi32, #tpu.memory_space<smem>>) -> (i32, i32, i32) {
    %c0_i32 = arith.constant 0 : i32
    %c0_i32_0 = arith.constant 0 : i32
    return %arg0, %c0_i32, %arg1 : i32, i32, i32
  }
  func.func @transform_7(%arg0: i32, %arg1: i32, %arg2: memref<2xi32, #tpu.memory_space<smem>>) -> (i32, i32, i32) {
    %c0_i32 = arith.constant 0 : i32
    %c0_i32_0 = arith.constant 0 : i32
    return %arg0, %arg1, %c0_i32 : i32, i32, i32
  }
}

</mosaic_0001>

<llo_original>
// kernel: tpu_custom_call.1
$region0: #{tpu_custom_call.1}
  #allocation0 [shape = 'u32[]', space=smem, size = 0x4, offset = 0x4, fixed_abs, tag = 'smem constant byte address 0x4 - core index']
  #allocation1 [shape = 'u32[72,128]{1,0:T(1,128)}', space=vmem, size = 0x9000, scoped, tag = 'internal scratch']
  #allocation2 [shape = 's32[1]{0}', space=sflag, size = 0x4, scoped, tag = 'scoped memory for tpu_custom_call.1']
  #allocation3 [shape = 'u8[512]{0}', space=smem, size = 0x200, scoped, tag = 'prefetched SMEM operand 0']
  #allocation4 [shape = 'f32[1,1]{1,0:T(1,128)S(1)}', space=vmem, size = 0x200, scoped, tag = 'scoped memory for tpu_custom_call.1']
  #allocation5 [shape = 'f32[1,1]{1,0:T(1,128)S(1)}', space=vmem, size = 0x200, scoped, tag = 'scoped memory for tpu_custom_call.1']
  %s0 = inlined_call_operand.vmem [shape: s32[2], index: 0, kind: input, shape index: {}]
  %s1 = inlined_call_operand.hbm [shape: bf16[2,24,128], index: 1, kind: input, shape index: {}]
  %s2 = inlined_call_operand.hbm [shape: bf16[128,128], index: 2, kind: input, shape index: {}]
  %s3 = inlined_call_operand.vmem [shape: f32[1,64], index: 3, kind: input, shape index: {}]
  %s4 = inlined_call_operand.vmem [shape: f32[1,64], index: 4, kind: input, shape index: {}]
  %s5 = inlined_call_operand.<no memory space> [shape: f32[1,1], index: 5, kind: input, shape index: {}]
  %s6 = inlined_call_operand.<no memory space> [shape: f32[1,1], index: 6, kind: input, shape index: {}]
  %s7 = inlined_call_operand.hbm [shape: f32[2,4,16], index: 7, kind: output, shape index: {0}]
  %s8 = inlined_call_operand.hbm [shape: bf16[2,16,512], index: 8, kind: output, shape index: {1}]
  %9 = xla_tuple %s7, %s8
  %s10 = sld [smem:[#allocation0]]
  $region73: #{tpu_custom_call.1} parent=0
    _
  %s12 = ssub.s32 1, %s10
  %s13 = scalar_select 0, %s12, %s10
  %s15 = sshll.u32 %s0, 4
  %s16 = int_to_ptr.vmem [resolvable:$true] %s15
  %18 = dma.vmem_to_smem %s16, 16, [#allocation3], [#allocation2]
  %v19 = vstv %s5
  %20 = vst [vmem:[#allocation4] sm:$0x1] %v19
  %v21 = vstv %s6
  %22 = vst [vmem:[#allocation5] sm:$0x1] %v21
  %24 = dma.done [#allocation2], 16
  %25 = sfence
  $region1: #{tpu_custom_call.1} parent=0
    #allocation6 [shape = 'u8[12288]{0}', space=vmem, size = 0x3000, scoped, tag = 'input window, operand 1']
    #allocation7 [shape = 's32[2]{0}', space=sflag, size = 0x8, scoped, tag = 'scoped memory for tpu_custom_call.1']
    #allocation8 [shape = 's32[2]{0}', space=sflag, size = 0x8, scoped, tag = 'scoped memory for tpu_custom_call.1']
    #allocation9 [shape = 'u8[32768]{0}', space=vmem, size = 0x8000, scoped, tag = 'input window, operand 2, single buffered']
    #allocation10 [shape = 's32[1]{0}', space=sflag, size = 0x4, scoped, tag = 'scoped memory for tpu_custom_call.1']
    #allocation11 [shape = 'u8[4096]{0}', space=vmem, size = 0x1000, scoped, tag = 'output window, operand 0']
    #allocation12 [shape = 'u8[32768]{0}', space=vmem, size = 0x8000, scoped, tag = 'output window, operand 1']
    #allocation13 [shape = 's32[2]{0}', space=sflag, size = 0x8, scoped, tag = 'scoped memory for tpu_custom_call.1']
    %26 = vsyncpa [#allocation7], 0
    %s27 = scalar_lea.sflag [#allocation7], 1
    %28 = vsyncpa %s27, 0
    %29 = vsyncpa [#allocation10], 0
    %30 = vsyncpa [#allocation8], 0
    %s31 = scalar_lea.sflag [#allocation8], 1
    %32 = vsyncpa %s31, 0
    %33 = vsyncpa [#allocation13], 0
    %s34 = scalar_lea.sflag [#allocation13], 1
    %35 = vsyncpa %s34, 0
    loop: start=0, step=1, limit=4
    $region2: #{tpu_custom_call.1} parent=1 // loop_pre_header
      _
    $region3: #{tpu_custom_call.1} parent=1 // loop_header
      %s37 = sphi 0, %s41
      %p38 = scmp.ge.s32.totalorder %s37, 4
      %s44 = sphi 0, %s56
      %s45 = sphi 0, %s52
      %s46 = sphi 0, %s44
      %s47 = sphi 0, %s45
      %s48 = sphi 0, %s46
      %s49 = sphi 0, %s47
      %s59 = sphi 0, %s61
      %s62 = sphi 0, %s59
      %s63 = sphi 0, %s62
      %s79 = sphi 0, %s63
      %s83 = sphi 0, %s83
      %s85 = sphi 0, %s83
      %s86 = sphi 0, %s85
      %s100 = sphi 0, %s86
      %s104 = sphi 0, %s104
      %s106 = sphi 0, %s104
      %s107 = sphi 0, %s106
      %s121 = sphi 0, %s107
      %s125 = sphi 0, %s125
      %s127 = sphi 0, %s125
      %s128 = sphi 0, %s127
      %s142 = sphi 0, %s128
      %s146 = sphi 0, %s146
      %s148 = sphi 0, %s146
      %s149 = sphi 0, %s148
      %s163 = sphi 0, %s149
      %s167 = sphi 0, %s167
      %s169 = sphi 0, %s167
      %s170 = sphi 0, %s169
      %s184 = sphi 0, %s170
      %s192 = sphi 0, %s194
      %s195 = sphi 0, %s192
      %s196 = sphi 0, %s195
      %s212 = sphi 0, %s196
      %s220 = sphi 0, %s222
      %s223 = sphi 0, %s220
      %s224 = sphi 0, %s223
      %s240 = sphi 0, %s224
    $region4: #{tpu_custom_call.1} parent=1 // loop_header_branch
      %40 = sbr.rel (%p38) target = $region8
    $region5: #{tpu_custom_call.1} parent=1 // loop_body
      %s42 = ssub.s32 %s37, 1
      %s43 = ssub.s32 %s37, 2
      %s50 = sadd.s32 1, %s45
      %p51 = scmp.ge.s32.totalorder %s50, 1
      %s52 = scalar_select %p51, 0, %s50
      %s53 = sadd.s32 1, %s44
      %s54 = scalar_select %p51, %s53, %s44
      %p55 = scmp.ge.s32.totalorder %s54, 2
      %s56 = scalar_select %p55, 0, %s54
      %s57 = ssub.s32 %s44, %s56
      %p58 = scmp.eq.s32.totalorder %s57, 0
      %s60 = sadd.s32 %s59, 1
      %s61 = scalar_select %p58, %s59, %s60
      %p64 = pneg %p58
      %p65 = scmp.eq.s32.totalorder %s37, 1
      %p66 = por %p64, %p65
      %p67 = scmp.ne.s32.totalorder %s59, %s62
      %p68 = scmp.eq.s32.totalorder %s37, 0
      %p69 = por %p67, %p68
      %p70 = scmp.ne.s32.totalorder %s59, %s62
      %p71 = scmp.eq.s32.totalorder %s42, 1
      %p72 = por %p70, %p71
      %p73 = scmp.ne.s32.totalorder %s62, %s63
      %p74 = scmp.eq.s32.totalorder %s42, 0
      %p75 = por %p73, %p74
      %p76 = scmp.ne.s32.totalorder %s62, %s63
      %p77 = scmp.eq.s32.totalorder %s43, 1
      %p78 = por %p76, %p77
      %p80 = scmp.ne.s32.totalorder %s63, %s79
      %p81 = scmp.eq.s32.totalorder %s43, 0
      %p82 = por %p80, %p81
      %s84 = sadd.s32 %s83, 1
      %p87 = scmp.eq.s32.totalorder %s37, 1
      %p88 = scmp.ne.s32.totalorder %s83, %s85
      %p89 = scmp.eq.s32.totalorder %s37, 0
      %p90 = por %p88, %p89
      %p91 = scmp.ne.s32.totalorder %s83, %s85
      %p92 = scmp.eq.s32.totalorder %s42, 1
      %p93 = por %p91, %p92
      %p94 = scmp.ne.s32.totalorder %s85, %s86
      %p95 = scmp.eq.s32.totalorder %s42, 0
      %p96 = por %p94, %p95
      %p97 = scmp.ne.s32.totalorder %s85, %s86
      %p98 = scmp.eq.s32.totalorder %s43, 1
      %p99 = por %p97, %p98
      %p101 = scmp.ne.s32.totalorder %s86, %s100
      %p102 = scmp.eq.s32.totalorder %s43, 0
      %p103 = por %p101, %p102
      %s105 = sadd.s32 %s104, 1
      %p108 = scmp.eq.s32.totalorder %s37, 1
      %p109 = scmp.ne.s32.totalorder %s104, %s106
      %p110 = scmp.eq.s32.totalorder %s37, 0
      %p111 = por %p109, %p110
      %p112 = scmp.ne.s32.totalorder %s104, %s106
      %p113 = scmp.eq.s32.totalorder %s42, 1
      %p114 = por %p112, %p113
      %p115 = scmp.ne.s32.totalorder %s106, %s107
      %p116 = scmp.eq.s32.totalorder %s42, 0
      %p117 = por %p115, %p116
      %p118 = scmp.ne.s32.totalorder %s106, %s107
      %p119 = scmp.eq.s32.totalorder %s43, 1
      %p120 = por %p118, %p119
      %p122 = scmp.ne.s32.totalorder %s107, %s121
      %p123 = scmp.eq.s32.totalorder %s43, 0
      %p124 = por %p122, %p123
      %s126 = sadd.s32 %s125, 1
      %p129 = scmp.eq.s32.totalorder %s37, 1
      %p130 = scmp.ne.s32.totalorder %s125, %s127
      %p131 = scmp.eq.s32.totalorder %s37, 0
      %p132 = por %p130, %p131
      %p133 = scmp.ne.s32.totalorder %s125, %s127
      %p134 = scmp.eq.s32.totalorder %s42, 1
      %p135 = por %p133, %p134
      %p136 = scmp.ne.s32.totalorder %s127, %s128
      %p137 = scmp.eq.s32.totalorder %s42, 0
      %p138 = por %p136, %p137
      %p139 = scmp.ne.s32.totalorder %s127, %s128
      %p140 = scmp.eq.s32.totalorder %s43, 1
      %p141 = por %p139, %p140
      %p143 = scmp.ne.s32.totalorder %s128, %s142
      %p144 = scmp.eq.s32.totalorder %s43, 0
      %p145 = por %p143, %p144
      %s147 = sadd.s32 %s146, 1
      %p150 = scmp.eq.s32.totalorder %s37, 1
      %p151 = scmp.ne.s32.totalorder %s146, %s148
      %p152 = scmp.eq.s32.totalorder %s37, 0
      %p153 = por %p151, %p152
      %p154 = scmp.ne.s32.totalorder %s146, %s148
      %p155 = scmp.eq.s32.totalorder %s42, 1
      %p156 = por %p154, %p155
      %p157 = scmp.ne.s32.totalorder %s148, %s149
      %p158 = scmp.eq.s32.totalorder %s42, 0
      %p159 = por %p157, %p158
      %p160 = scmp.ne.s32.totalorder %s148, %s149
      %p161 = scmp.eq.s32.totalorder %s43, 1
      %p162 = por %p160, %p161
      %p164 = scmp.ne.s32.totalorder %s149, %s163
      %p165 = scmp.eq.s32.totalorder %s43, 0
      %p166 = por %p164, %p165
      %s168 = sadd.s32 %s167, 1
      %p171 = scmp.eq.s32.totalorder %s37, 1
      %p172 = scmp.ne.s32.totalorder %s167, %s169
      %p173 = scmp.eq.s32.totalorder %s37, 0
      %p174 = por %p172, %p173
      %p175 = scmp.ne.s32.totalorder %s167, %s169
      %p176 = scmp.eq.s32.totalorder %s42, 1
      %p177 = por %p175, %p176
      %p178 = scmp.ne.s32.totalorder %s169, %s170
      %p179 = scmp.eq.s32.totalorder %s42, 0
      %p180 = por %p178, %p179
      %p181 = scmp.ne.s32.totalorder %s169, %s170
      %p182 = scmp.eq.s32.totalorder %s43, 1
      %p183 = por %p181, %p182
      %p185 = scmp.ne.s32.totalorder %s170, %s184
      %p186 = scmp.eq.s32.totalorder %s43, 0
      %p187 = por %p185, %p186
      %s188 = ssub.s32 %s44, %s56
      %s189 = ssub.s32 %s45, %s52
      %s190 = sor.u32 %s188, %s189
      %p191 = scmp.eq.s32.totalorder %s190, 0
      %s193 = sadd.s32 %s192, 1
      %s194 = scalar_select %p191, %s192, %s193
      %p197 = pneg %p191
      %p198 = scmp.eq.s32.totalorder %s37, 1
      %p199 = por %p197, %p198
      %p200 = scmp.ne.s32.totalorder %s192, %s195
      %p201 = scmp.eq.s32.totalorder %s37, 0
      %p202 = por %p200, %p201
      %p203 = scmp.ne.s32.totalorder %s192, %s195
      %p204 = scmp.eq.s32.totalorder %s42, 1
      %p205 = por %p203, %p204
      %p206 = scmp.ne.s32.totalorder %s195, %s196
      %p207 = scmp.eq.s32.totalorder %s42, 0
      %p208 = por %p206, %p207
      %p209 = scmp.ne.s32.totalorder %s195, %s196
      %p210 = scmp.eq.s32.totalorder %s43, 1
      %p211 = por %p209, %p210
      %p213 = scmp.ne.s32.totalorder %s196, %s212
      %p214 = scmp.eq.s32.totalorder %s43, 0
      %p215 = por %p213, %p214
      %s216 = ssub.s32 %s44, %s56
      %s217 = ssub.s32 %s45, %s52
      %s218 = sor.u32 %s216, %s217
      %p219 = scmp.eq.s32.totalorder %s218, 0
      %s221 = sadd.s32 %s220, 1
      %s222 = scalar_select %p219, %s220, %s221
      %p225 = pneg %p219
      %p226 = scmp.eq.s32.totalorder %s37, 1
      %p227 = por %p225, %p226
      %p228 = scmp.ne.s32.totalorder %s220, %s223
      %p229 = scmp.eq.s32.totalorder %s37, 0
      %p230 = por %p228, %p229
      %p231 = scmp.ne.s32.totalorder %s220, %s223
      %p232 = scmp.eq.s32.totalorder %s42, 1
      %p233 = por %p231, %p232
      %p234 = scmp.ne.s32.totalorder %s223, %s224
      %p235 = scmp.eq.s32.totalorder %s42, 0
      %p236 = por %p234, %p235
      %p237 = scmp.ne.s32.totalorder %s223, %s224
      %p238 = scmp.eq.s32.totalorder %s43, 1
      %p239 = por %p237, %p238
      %p241 = scmp.ne.s32.totalorder %s224, %s240
      %p242 = scmp.eq.s32.totalorder %s43, 0
      %p243 = por %p241, %p242
      %p244 = scmp.le.s32.totalorder 1, %s37
      %p245 = scmp.lt.s32.totalorder %s37, 3
      %p246 = pnand %p244, %p245
      %p247 = pneg %p246
      // Predicated region
      $region9: #{tpu_custom_call.1} parent=5 // pred_check
        _
      $region10: #{tpu_custom_call.1} parent=5 // pred_check_branch
        %249 = sbr.rel (%p246) target = $region12
      $region11: #{tpu_custom_call.1} parent=5 // pred_region
        %s250 = ssub.s32 %s37, 1
        // Predicated region
        $region13: #{tpu_custom_call.1} parent=11 // pred_check
          %p251 = pneg %p96
        $region14: #{tpu_custom_call.1} parent=11 // pred_check_branch
          %253 = sbr.rel (%p251) target = $region16
        $region15: #{tpu_custom_call.1} parent=11 // pred_region
          %255 = vsyncadd [#allocation10], 0
          %s256 = sshll.u32 %s2, 4
          %s257 = int_to_ptr.hbm [resolvable:$true] %s256
          %s258 = sshll.u32 [#allocation9], 4
          %s259 = int_to_ptr.vmem [resolvable:$true] %s258
          %264 = dma.hbm_to_vmem [thread:$0]  %s257, 1024, %s259, [#allocation10], 64, 64, 4
        $region16: #{tpu_custom_call.1} parent=11 // pred_fallthru
          _
        // Predicated region
        $region17: #{tpu_custom_call.1} parent=11 // pred_check
          %p265 = pneg %p117
        $region18: #{tpu_custom_call.1} parent=11 // pred_check_branch
          %267 = sbr.rel (%p265) target = $region20
        $region19: #{tpu_custom_call.1} parent=11 // pred_region
          _
        $region20: #{tpu_custom_call.1} parent=11 // pred_fallthru
          _
        // Predicated region
        $region21: #{tpu_custom_call.1} parent=11 // pred_check
          %p268 = pneg %p138
        $region22: #{tpu_custom_call.1} parent=11 // pred_check_branch
          %270 = sbr.rel (%p268) target = $region24
        $region23: #{tpu_custom_call.1} parent=11 // pred_region
          _
        $region24: #{tpu_custom_call.1} parent=11 // pred_fallthru
          _
        // Predicated region
        $region25: #{tpu_custom_call.1} parent=11 // pred_check
          %p271 = pneg %p159
        $region26: #{tpu_custom_call.1} parent=11 // pred_check_branch
          %273 = sbr.rel (%p271) target = $region28
        $region27: #{tpu_custom_call.1} parent=11 // pred_region
          _
        $region28: #{tpu_custom_call.1} parent=11 // pred_fallthru
          _
        // Predicated region
        $region29: #{tpu_custom_call.1} parent=11 // pred_check
          %p274 = pneg %p180
        $region30: #{tpu_custom_call.1} parent=11 // pred_check_branch
          %276 = sbr.rel (%p274) target = $region32
        $region31: #{tpu_custom_call.1} parent=11 // pred_region
          _
        $region32: #{tpu_custom_call.1} parent=11 // pred_fallthru
          _
      $region12: #{tpu_custom_call.1} parent=5 // pred_fallthru
        _
      %p277 = scmp.lt.s32.totalorder %s37, 2
      // Predicated region
      $region33: #{tpu_custom_call.1} parent=5 // pred_check
        %p278 = pneg %p277
      $region34: #{tpu_custom_call.1} parent=5 // pred_check_branch
        %280 = sbr.rel (%p278) target = $region36
      $region35: #{tpu_custom_call.1} parent=5 // pred_region
        // Predicated region
        $region37: #{tpu_custom_call.1} parent=35 // pred_check
          %p281 = pneg %p69
        $region38: #{tpu_custom_call.1} parent=35 // pred_check_branch
          %283 = sbr.rel (%p281) target = $region40
        $region39: #{tpu_custom_call.1} parent=35 // pred_region
          %s284 = sand.u32 %s59, 1
          %s285 = scalar_lea.sflag [#allocation7], %s284
          %s286 = sand.u32 %s59, 1
          %s287 = smul.addr %s286, 12
          %s288 = scalar_lea.vmem [#allocation6], %s287
          %290 = vsyncadd %s285, 0
          %s291 = smul.addr %s44, 3
          %s292 = smul.addr %s291, 4
          %s293 = scalar_lea.hbm %s1, %s292
          %s294 = sshll.u32 %s293, 4
          %s295 = int_to_ptr.hbm [resolvable:$true] %s294
          %s296 = sshll.u32 %s288, 4
          %s297 = int_to_ptr.vmem [resolvable:$true] %s296
          %302 = dma.hbm_to_vmem [thread:$0]  %s295, 192, %s297, %s285, 64, 64, 4
        $region40: #{tpu_custom_call.1} parent=35 // pred_fallthru
          _
      $region36: #{tpu_custom_call.1} parent=5 // pred_fallthru
        _
      %p303 = scmp.le.s32.totalorder 1, %s37
      %p304 = scmp.lt.s32.totalorder %s37, 3
      %p305 = pnand %p303, %p304
      %p306 = pneg %p305
      // Predicated region
      $region41: #{tpu_custom_call.1} parent=5 // pred_check
        _
      $region42: #{tpu_custom_call.1} parent=5 // pred_check_branch
        %308 = sbr.rel (%p305) target = $region44
      $region43: #{tpu_custom_call.1} parent=5 // pred_region
        %s309 = ssub.s32 %s37, 1
        %s310 = sand.u32 %s62, 1
        %s311 = scalar_lea.sflag [#allocation7], %s310
        %s312 = sand.u32 %s62, 1
        %s313 = smul.addr %s312, 12
        %s314 = scalar_lea.vmem [#allocation6], %s313
        // Predicated region
        $region45: #{tpu_custom_call.1} parent=43 // pred_check
          %p315 = pneg %p75
        $region46: #{tpu_custom_call.1} parent=43 // pred_check_branch
          %317 = sbr.rel (%p315) target = $region48
        $region47: #{tpu_custom_call.1} parent=43 // pred_region
          %319 = dma.done %s311, 192
        $region48: #{tpu_custom_call.1} parent=43 // pred_fallthru
          _
        // Predicated region
        $region49: #{tpu_custom_call.1} parent=43 // pred_check
          %p320 = pneg %p96
        $region50: #{tpu_custom_call.1} parent=43 // pred_check_branch
          %322 = sbr.rel (%p320) target = $region52
        $region51: #{tpu_custom_call.1} parent=43 // pred_region
          %324 = dma.done [#allocation10], 1024
        $region52: #{tpu_custom_call.1} parent=43 // pred_fallthru
          _
        %s325 = sand.u32 %s62, 1
        %s326 = scalar_lea.sflag [#allocation7], %s325
        %s327 = sand.u32 %s62, 1
        %s328 = smul.addr %s327, 12
        %s329 = scalar_lea.vmem [#allocation6], %s328
        %p330 = pneg %p75
        %p331 = pneg %p72
        %p332 = pneg %p96
        %p333 = pneg %p93
        %p334 = pneg %p117
        %p335 = pneg %p114
        %p336 = pneg %p138
        %p337 = pneg %p135
        %p338 = pneg %p159
        %p339 = pneg %p156
        %p340 = pneg %p180
        %p341 = pneg %p177
        %p342 = pneg %p208
        %p343 = pneg %p205
        %s344 = sand.u32 %s195, 1
        %s345 = scalar_lea.sflag [#allocation8], %s344
        %s346 = sand.u32 %s195, 1
        %s347 = smul.addr %s346, 4
        %s348 = scalar_lea.vmem [#allocation11], %s347
        %p349 = pneg %p236
        %p350 = pneg %p233
        %s351 = sand.u32 %s223, 1
        %s352 = scalar_lea.sflag [#allocation13], %s351
        %s353 = sand.u32 %s223, 1
        %s354 = smul.addr %s353, 32
        %s355 = scalar_lea.vmem [#allocation12], %s354
        %s356 = smul.u32 2, %s47
        %s357 = sld [smem:[#allocation3 + %s46]]
        %v358 = vld [vmem:[%s314] sm:$0xf]
        %v359 = vld [vmem:[%s314 + $0x4] sm:$0xf]
        %v360 = vld [vmem:[%s314 + $0x8] sm:$0xf]
        %v361 = vunpack.c.l.bf16 %v358
        %v362 = vunpack.c.l.bf16 %v359
        %v363 = vunpack.c.l.bf16 %v360
        %v364 = vld [vmem:[#allocation9] sm:$0xf]
        %v365 = vld [vmem:[#allocation9 + $0x4] sm:$0xf]
        %v366 = vld [vmem:[#allocation9 + $0x8] sm:$0xf]
        %v367 = vld [vmem:[#allocation9 + $0xc] sm:$0xf]
        %v368 = vld [vmem:[#allocation9 + $0x10] sm:$0xf]
        %v369 = vld [vmem:[#allocation9 + $0x14] sm:$0xf]
        %v370 = vld [vmem:[#allocation9 + $0x18] sm:$0xf]
        %v371 = vld [vmem:[#allocation9 + $0x1c] sm:$0xf]
        %v372 = vld [vmem:[#allocation9 + $0x20] sm:$0xf]
        %v373 = vld [vmem:[#allocation9 + $0x24] sm:$0xf]
        %v374 = vld [vmem:[#allocation9 + $0x28] sm:$0xf]
        %v375 = vld [vmem:[#allocation9 + $0x2c] sm:$0xf]
        %v376 = vld [vmem:[#allocation9 + $0x30] sm:$0xf]
        %v377 = vld [vmem:[#allocation9 + $0x34] sm:$0xf]
        %v378 = vld [vmem:[#allocation9 + $0x38] sm:$0xf]
        %v379 = vld [vmem:[#allocation9 + $0x3c] sm:$0xf]
        %v383 = vunpack.c.l.b16 %v358
        %v384 = vunpack.c.l.b16 %v359
        %v385 = vunpack.c.l.b16 %v360
        %v386 = vpack.c.b16 %v384, %v383
        %v387 = vpack.c.b16 %v385, %v385
        %v406 = vunpack.c.l.b16 %v364
        %v407 = vunpack.c.l.b16 %v365
        %v408 = vunpack.c.l.b16 %v366
        %v409 = vunpack.c.l.b16 %v367
        %v410 = vunpack.c.l.b16 %v368
        %v411 = vunpack.c.l.b16 %v369
        %v412 = vunpack.c.l.b16 %v370
        %v413 = vunpack.c.l.b16 %v371
        %v414 = vunpack.c.l.b16 %v372
        %v415 = vunpack.c.l.b16 %v373
        %v416 = vunpack.c.l.b16 %v374
        %v417 = vunpack.c.l.b16 %v375
        %v418 = vunpack.c.l.b16 %v376
        %v419 = vunpack.c.l.b16 %v377
        %v420 = vunpack.c.l.b16 %v378
        %v421 = vunpack.c.l.b16 %v379
        %v422 = vpack.c.b16 %v407, %v406
        %v423 = vpack.c.b16 %v409, %v408
        %v424 = vpack.c.b16 %v411, %v410
        %v425 = vpack.c.b16 %v413, %v412
        %v426 = vpack.c.b16 %v415, %v414
        %v427 = vpack.c.b16 %v417, %v416
        %v428 = vpack.c.b16 %v419, %v418
        %v429 = vpack.c.b16 %v421, %v420
        %438 = vmatpush.bf16.msra.mxu0 %v429
        %439 = vmatpush.bf16.msra.mxu0 %v428
        %440 = vmatpush.bf16.msra.mxu0 %v427
        %441 = vmatpush.bf16.msra.mxu0 %v426
        %442 = vmatpush.bf16.msra.mxu0 %v425
        %443 = vmatpush.bf16.msra.mxu0 %v424
        %444 = vmatpush.bf16.msra.mxu0 %v423
        %445 = vmatpush.bf16.msra.mxu0 %v422
        %446 = vmatmul.bf16.gmra.mxu0 %v386
        %v447 = vpop.f32.mrf.mxu0
        %v448 = vadd.f32 0.0, %v447
        %v449 = vpop.f32.mrf.mxu0
        %v450 = vadd.f32 0.0, %v449
        %451 = vmatmul.bf16.gmra.mxu0 %v387
        %v452 = vpop.f32.mrf.mxu0
        %v453 = vadd.f32 0.0, %v452
        %v454 = vpop.f32.mrf.mxu0
        %455 = vdwg.mxu0
        %v456 = vld [vmem:[%s3] sm:$0x1]
        %v458 = vperm.slane %v456, 0
        %v460 = vadd.f32 %v448, %v458
        %v461 = vadd.f32 %v450, %v458
        %v462 = vadd.f32 %v453, %v458
        %v463 = vmax.f32 %v460, 0.0
        %v464 = vmax.f32 %v461, 0.0
        %v465 = vmax.f32 %v462, 0.0
        %v466 = vld [vmem:[%s4] sm:$0x1]
        %v468 = vperm.slane %v466, 0
        %v470 = vmul.f32 %v463, %v468
        %v471 = vmul.f32 %v464, %v468
        %v472 = vmul.f32 %v465, %v468
        %vm473 = vcmask 523264
        %v474 = vsel %vm473, %v470, 0.0
        %475 = vadd.xlane.f32.xlu0 %v474
        %v476 = vpop.xlane.xlu0 %475
        %v477 = vsel %vm473, %v471, 0.0
        %478 = vadd.xlane.f32.xlu0 %v477
        %v479 = vpop.xlane.xlu0 %478
        %v480 = vsel %vm473, %v472, 0.0
        %481 = vadd.xlane.f32.xlu0 %v480
        %v482 = vpop.xlane.xlu0 %481
        %v483 = vld [vmem:[#allocation4] sm:$0x1]
        %v485 = vperm.slane %v483, 0
        %v487 = vadd.f32 %v476, %v485
        %v488 = vadd.f32 %v479, %v485
        %v489 = vadd.f32 %v482, %v485
        %v490 = vlaneseq
        %v491 = vshrl.u32 %v490, 7
        %v492 = vadd.s32 %v491, 8
        %493 = vst [vmem:[%s355] sm:$0xf] %v358
        %494 = vst [vmem:[%s355 + $0x10] sm:$0xf] %v359
        %v495 = vadd.s32 %v491, 1
        %v496 = vadd.s32 %v492, 1
        %v497 = vstv %s357
        %vm498 = vcmp.lt.s32.totalorder %v495, %v497
        %vm499 = vcmp.lt.s32.totalorder %v496, %v497
        %vm503 = vcmask 1046528
        %v504 = vrot.slane %v487, 1
        %v505 = vrot.slane %v488, 1
        %v506 = vsel %vm503, %v504, %v505
        %v507 = vrot.slane %v489, 1
        %v508 = vsel %vm503, %v505, %v507
        %v511 = vmax.f32 %v487, %v506
        %v512 = vmax.f32 %v488, %v508
        %v513 = vsel %vm498, %v511, %v487
        %v514 = vsel %vm499, %v512, %v488
        %v515 = vsub.f32 %v487, %v513
        %v516 = vsub.f32 %v488, %v514
        %v517 = vmul.f32 %v515, 1.442695
        %v518 = vpow.pop %v517
        %v519 = vmul.f32 %v516, 1.442695
        %v520 = vpow.pop %v519
        %vm523 = vcmask 1040384
        %v524 = vrot.slane %v513, 7
        %v525 = vrot.slane %v514, 7
        %v526 = vsel %vm523, %v524, %v525
        %v530 = vsub.f32 %v487, %v524
        %v531 = vsub.f32 %v488, %v526
        %v532 = vsub.f32 %v489, %v525
        %v536 = vrot.slane %v530, 1
        %v537 = vrot.slane %v531, 1
        %v538 = vsel %vm503, %v536, %v537
        %v539 = vrot.slane %v532, 1
        %v540 = vsel %vm503, %v537, %v539
        %v543 = vsel %vm498, %v538, -1e+30
        %v544 = vsel %vm499, %v540, -1e+30
        %v545 = vmul.f32 %v543, 1.442695
        %v546 = vpow.pop %v545
        %v547 = vmul.f32 %v544, 1.442695
        %v548 = vpow.pop %v547
        %550 = vset.pattern.permute.xlu0 0
        %551 = vperm.xlu0 %550, %v518
        %v552 = vpop.permute.xlu0 %551
        %555 = vset.pattern.permute.xlu0 0
        %556 = vperm.xlu0 %555, %v520
        %v557 = vpop.permute.xlu0 %556
        %v559 = vmul.f32 %v361, %v552
        %v560 = vmul.f32 %v362, %v557
        %562 = vset.pattern.permute.xlu0 0
        %563 = vperm.xlu0 %562, %v546
        %v564 = vpop.permute.xlu0 %563
        %567 = vset.pattern.permute.xlu0 0
        %568 = vperm.xlu0 %567, %v548
        %v569 = vpop.permute.xlu0 %568
        %v574 = vrot.slane %v361, 1
        %v575 = vrot.slane %v362, 1
        %v576 = vsel %vm503, %v574, %v575
        %v577 = vrot.slane %v363, 1
        %v578 = vsel %vm503, %v575, %v577
        %v581 = vmul.f32 %v564, %v576
        %v582 = vmul.f32 %v569, %v578
        %v583 = vadd.f32 %v559, %v581
        %v584 = vadd.f32 %v560, %v582
        %v585 = vadd.f32 %v518, %v546
        %v586 = vadd.f32 %v520, %v548
        %587 = vrot.lane.b32.xlu0 %v518, 64
        %v588 = vpop.permute.xlu0 %587
        %589 = vrot.lane.b32.xlu0 %v520, 64
        %v590 = vpop.permute.xlu0 %589
        %v593 = vmul.f32 %v448, %v588
        %v594 = vmul.f32 %v450, %v590
        %v598 = vrot.slane %v448, 1
        %v599 = vrot.slane %v450, 1
        %v600 = vsel %vm503, %v598, %v599
        %v601 = vrot.slane %v453, 1
        %v602 = vsel %vm503, %v599, %v601
        %603 = vrot.lane.b32.xlu0 %v600, 64
        %v604 = vpop.permute.xlu0 %603
        %605 = vrot.lane.b32.xlu0 %v602, 64
        %v606 = vpop.permute.xlu0 %605
        %v609 = vmul.f32 %v546, %v604
        %v610 = vmul.f32 %v548, %v606
        %613 = vrot.lane.b32.xlu0 %v609, 64
        %v614 = vpop.permute.xlu0 %613
        %615 = vrot.lane.b32.xlu0 %v610, 64
        %v616 = vpop.permute.xlu0 %615
        %v619 = vadd.f32 %v593, %v614
        %v620 = vadd.f32 %v594, %v616
        %v621 = vrcp.pop %v585
        %v622 = vrcp.pop %v586
        %624 = vset.pattern.permute.xlu0 0
        %625 = vperm.xlu0 %624, %v621
        %v626 = vpop.permute.xlu0 %625
        %629 = vset.pattern.permute.xlu0 0
        %630 = vperm.xlu0 %629, %v622
        %v631 = vpop.permute.xlu0 %630
        %v633 = vmul.f32 %v583, %v626
        %v634 = vmul.f32 %v584, %v631
        %v635 = vpack.c.bf16 %v633, %v633
        %v636 = vpack.c.bf16 %v634, %v634
        %637 = vst [vmem:[%s355 + $0x4] sm:$0xf] %v635
        %638 = vst [vmem:[%s355 + $0x14] sm:$0xf] %v636
        %641 = vrot.lane.b32.xlu0 %v585, 64
        %v642 = vpop.permute.xlu0 %641
        %643 = vrot.lane.b32.xlu0 %v586, 64
        %v644 = vpop.permute.xlu0 %643
        %v647 = vrcp.pop %v642
        %v648 = vmul.f32 %v642, %v647
        %v649 = vsub.f32 1.0, %v648
        %v650 = vmul.f32 %v647, %v649
        %v651 = vadd.f32 %v647, %v650
        %vm652 = vweird.f32 %v642
        %vm653 = vweird.f32 %v647
        %vm654 = vmor %vm652, %vm653
        %v655 = vsel %vm654, %v647, %v651
        %v656 = vand.u32 2147483647, %v642
        %vm657 = vcmp.eq.f32.partialorder %v656, 8.507059e+37
        %v658 = vand.u32 %v642, 2147483648
        %v659 = vor.u32 1.1754944e-38, %v658
        %v660 = vsel %vm657, %v659, %v655
        %v661 = vmul.f32 %v619, %v660
        %v662 = vrcp.pop %v644
        %v663 = vmul.f32 %v644, %v662
        %v664 = vsub.f32 1.0, %v663
        %v665 = vmul.f32 %v662, %v664
        %v666 = vadd.f32 %v662, %v665
        %vm667 = vweird.f32 %v644
        %vm668 = vweird.f32 %v662
        %vm669 = vmor %vm667, %vm668
        %v670 = vsel %vm669, %v662, %v666
        %v671 = vand.u32 2147483647, %v644
        %vm672 = vcmp.eq.f32.partialorder %v671, 8.507059e+37
        %v673 = vand.u32 %v644, 2147483648
        %v674 = vor.u32 1.1754944e-38, %v673
        %v675 = vsel %vm672, %v674, %v670
        %v676 = vmul.f32 %v620, %v675
        %v677 = vadd.s32 %v491, 2
        %v678 = vadd.s32 %v492, 2
        %vm679 = vcmp.lt.s32.totalorder %v677, %v497
        %vm680 = vcmp.lt.s32.totalorder %v678, %v497
        %vm681 = vcmask 1045504
        %v682 = vrot.slane %v487, 2
        %v683 = vrot.slane %v488, 2
        %v684 = vsel %vm681, %v682, %v683
        %v685 = vrot.slane %v489, 2
        %v686 = vsel %vm681, %v683, %v685
        %v689 = vmax.f32 %v513, %v684
        %v690 = vmax.f32 %v514, %v686
        %v691 = vsel %vm679, %v689, %v513
        %v692 = vsel %vm680, %v690, %v514
        %v693 = vsub.f32 %v513, %v691
        %v694 = vsub.f32 %v514, %v692
        %v695 = vmul.f32 %v693, 1.442695
        %v696 = vpow.pop %v695
        %v697 = vmul.f32 %v694, 1.442695
        %v698 = vpow.pop %v697
        %vm701 = vcmask 1041408
        %v702 = vrot.slane %v691, 6
        %v703 = vrot.slane %v692, 6
        %v704 = vsel %vm701, %v702, %v703
        %v708 = vsub.f32 %v487, %v702
        %v709 = vsub.f32 %v488, %v704
        %v710 = vsub.f32 %v489, %v703
        %v714 = vrot.slane %v708, 2
        %v715 = vrot.slane %v709, 2
        %v716 = vsel %vm681, %v714, %v715
        %v717 = vrot.slane %v710, 2
        %v718 = vsel %vm681, %v715, %v717
        %v721 = vsel %vm679, %v716, -1e+30
        %v722 = vsel %vm680, %v718, -1e+30
        %v723 = vmul.f32 %v721, 1.442695
        %v724 = vpow.pop %v723
        %v725 = vmul.f32 %v722, 1.442695
        %v726 = vpow.pop %v725
        %728 = vset.pattern.permute.xlu0 0
        %729 = vperm.xlu0 %728, %v696
        %v730 = vpop.permute.xlu0 %729
        %733 = vset.pattern.permute.xlu0 0
        %734 = vperm.xlu0 %733, %v698
        %v735 = vpop.permute.xlu0 %734
        %v737 = vmul.f32 %v583, %v730
        %v738 = vmul.f32 %v584, %v735
        %740 = vset.pattern.permute.xlu0 0
        %741 = vperm.xlu0 %740, %v724
        %v742 = vpop.permute.xlu0 %741
        %745 = vset.pattern.permute.xlu0 0
        %746 = vperm.xlu0 %745, %v726
        %v747 = vpop.permute.xlu0 %746
        %v749 = vrot.slane %v361, 2
        %v750 = vrot.slane %v362, 2
        %v751 = vsel %vm681, %v749, %v750
        %v752 = vrot.slane %v363, 2
        %v753 = vsel %vm681, %v750, %v752
        %v756 = vmul.f32 %v742, %v751
        %v757 = vmul.f32 %v747, %v753
        %v758 = vadd.f32 %v737, %v756
        %v759 = vadd.f32 %v738, %v757
        %v760 = vmul.f32 %v585, %v696
        %v761 = vmul.f32 %v586, %v698
        %v762 = vadd.f32 %v760, %v724
        %v763 = vadd.f32 %v761, %v726
        %764 = vrot.lane.b32.xlu0 %v696, 64
        %v765 = vpop.permute.xlu0 %764
        %766 = vrot.lane.b32.xlu0 %v698, 64
        %v767 = vpop.permute.xlu0 %766
        %v770 = vmul.f32 %v619, %v765
        %v771 = vmul.f32 %v620, %v767
        %v772 = vrot.slane %v448, 2
        %v773 = vrot.slane %v450, 2
        %v774 = vsel %vm681, %v772, %v773
        %v775 = vrot.slane %v453, 2
        %v776 = vsel %vm681, %v773, %v775
        %777 = vrot.lane.b32.xlu0 %v774, 64
        %v778 = vpop.permute.xlu0 %777
        %779 = vrot.lane.b32.xlu0 %v776, 64
        %v780 = vpop.permute.xlu0 %779
        %v783 = vmul.f32 %v724, %v778
        %v784 = vmul.f32 %v726, %v780
        %787 = vrot.lane.b32.xlu0 %v783, 64
        %v788 = vpop.permute.xlu0 %787
        %789 = vrot.lane.b32.xlu0 %v784, 64
        %v790 = vpop.permute.xlu0 %789
        %v793 = vadd.f32 %v770, %v788
        %v794 = vadd.f32 %v771, %v790
        %v795 = vrcp.pop %v762
        %v796 = vrcp.pop %v763
        %798 = vset.pattern.permute.xlu0 0
        %799 = vperm.xlu0 %798, %v795
        %v800 = vpop.permute.xlu0 %799
        %803 = vset.pattern.permute.xlu0 0
        %804 = vperm.xlu0 %803, %v796
        %v805 = vpop.permute.xlu0 %804
        %v807 = vmul.f32 %v758, %v800
        %v808 = vmul.f32 %v759, %v805
        %v809 = vpack.c.bf16 %v807, %v807
        %v810 = vpack.c.bf16 %v808, %v808
        %811 = vst [vmem:[%s355 + $0x8] sm:$0xf] %v809
        %812 = vst [vmem:[%s355 + $0x18] sm:$0xf] %v810
        %815 = vrot.lane.b32.xlu0 %v762, 64
        %v816 = vpop.permute.xlu0 %815
        %817 = vrot.lane.b32.xlu0 %v763, 64
        %v818 = vpop.permute.xlu0 %817
        %v821 = vrcp.pop %v816
        %v822 = vmul.f32 %v816, %v821
        %v823 = vsub.f32 1.0, %v822
        %v824 = vmul.f32 %v821, %v823
        %v825 = vadd.f32 %v821, %v824
        %vm826 = vweird.f32 %v816
        %vm827 = vweird.f32 %v821
        %vm828 = vmor %vm826, %vm827
        %v829 = vsel %vm828, %v821, %v825
        %v830 = vand.u32 2147483647, %v816
        %vm831 = vcmp.eq.f32.partialorder %v830, 8.507059e+37
        %v832 = vand.u32 %v816, 2147483648
        %v833 = vor.u32 1.1754944e-38, %v832
        %v834 = vsel %vm831, %v833, %v829
        %v835 = vmul.f32 %v793, %v834
        %v836 = vrcp.pop %v818
        %v837 = vmul.f32 %v818, %v836
        %v838 = vsub.f32 1.0, %v837
        %v839 = vmul.f32 %v836, %v838
        %v840 = vadd.f32 %v836, %v839
        %vm841 = vweird.f32 %v818
        %vm842 = vweird.f32 %v836
        %vm843 = vmor %vm841, %vm842
        %v844 = vsel %vm843, %v836, %v840
        %v845 = vand.u32 2147483647, %v818
        %vm846 = vcmp.eq.f32.partialorder %v845, 8.507059e+37
        %v847 = vand.u32 %v818, 2147483648
        %v848 = vor.u32 1.1754944e-38, %v847
        %v849 = vsel %vm846, %v848, %v844
        %v850 = vmul.f32 %v794, %v849
        %v851 = vadd.s32 %v491, 3
        %v852 = vadd.s32 %v492, 3
        %vm853 = vcmp.lt.s32.totalorder %v851, %v497
        %vm854 = vcmp.lt.s32.totalorder %v852, %v497
        %vm855 = vcmask 1044480
        %v856 = vrot.slane %v487, 3
        %v857 = vrot.slane %v488, 3
        %v858 = vsel %vm855, %v856, %v857
        %v859 = vrot.slane %v489, 3
        %v860 = vsel %vm855, %v857, %v859
        %v863 = vmax.f32 %v691, %v858
        %v864 = vmax.f32 %v692, %v860
        %v865 = vsel %vm853, %v863, %v691
        %v866 = vsel %vm854, %v864, %v692
        %v867 = vsub.f32 %v691, %v865
        %v868 = vsub.f32 %v692, %v866
        %v869 = vmul.f32 %v867, 1.442695
        %v870 = vpow.pop %v869
        %v871 = vmul.f32 %v868, 1.442695
        %v872 = vpow.pop %v871
        %vm875 = vcmask 1042432
        %v876 = vrot.slane %v865, 5
        %v877 = vrot.slane %v866, 5
        %v878 = vsel %vm875, %v876, %v877
        %v882 = vsub.f32 %v487, %v876
        %v883 = vsub.f32 %v488, %v878
        %v884 = vsub.f32 %v489, %v877
        %v888 = vrot.slane %v882, 3
        %v889 = vrot.slane %v883, 3
        %v890 = vsel %vm855, %v888, %v889
        %v891 = vrot.slane %v884, 3
        %v892 = vsel %vm855, %v889, %v891
        %v895 = vsel %vm853, %v890, -1e+30
        %v896 = vsel %vm854, %v892, -1e+30
        %v897 = vmul.f32 %v895, 1.442695
        %v898 = vpow.pop %v897
        %v899 = vmul.f32 %v896, 1.442695
        %v900 = vpow.pop %v899
        %902 = vset.pattern.permute.xlu0 0
        %903 = vperm.xlu0 %902, %v870
        %v904 = vpop.permute.xlu0 %903
        %907 = vset.pattern.permute.xlu0 0
        %908 = vperm.xlu0 %907, %v872
        %v909 = vpop.permute.xlu0 %908
        %v911 = vmul.f32 %v758, %v904
        %v912 = vmul.f32 %v759, %v909
        %914 = vset.pattern.permute.xlu0 0
        %915 = vperm.xlu0 %914, %v898
        %v916 = vpop.permute.xlu0 %915
        %919 = vset.pattern.permute.xlu0 0
        %920 = vperm.xlu0 %919, %v900
        %v921 = vpop.permute.xlu0 %920
        %v923 = vrot.slane %v361, 3
        %v924 = vrot.slane %v362, 3
        %v925 = vsel %vm855, %v923, %v924
        %v926 = vrot.slane %v363, 3
        %v927 = vsel %vm855, %v924, %v926
        %v930 = vmul.f32 %v916, %v925
        %v931 = vmul.f32 %v921, %v927
        %v932 = vadd.f32 %v911, %v930
        %v933 = vadd.f32 %v912, %v931
        %v934 = vmul.f32 %v762, %v870
        %v935 = vmul.f32 %v763, %v872
        %v936 = vadd.f32 %v934, %v898
        %v937 = vadd.f32 %v935, %v900
        %938 = vrot.lane.b32.xlu0 %v870, 64
        %v939 = vpop.permute.xlu0 %938
        %940 = vrot.lane.b32.xlu0 %v872, 64
        %v941 = vpop.permute.xlu0 %940
        %v944 = vmul.f32 %v793, %v939
        %v945 = vmul.f32 %v794, %v941
        %v946 = vrot.slane %v448, 3
        %v947 = vrot.slane %v450, 3
        %v948 = vsel %vm855, %v946, %v947
        %v949 = vrot.slane %v453, 3
        %v950 = vsel %vm855, %v947, %v949
        %951 = vrot.lane.b32.xlu0 %v948, 64
        %v952 = vpop.permute.xlu0 %951
        %953 = vrot.lane.b32.xlu0 %v950, 64
        %v954 = vpop.permute.xlu0 %953
        %v957 = vmul.f32 %v898, %v952
        %v958 = vmul.f32 %v900, %v954
        %961 = vrot.lane.b32.xlu0 %v957, 64
        %v962 = vpop.permute.xlu0 %961
        %963 = vrot.lane.b32.xlu0 %v958, 64
        %v964 = vpop.permute.xlu0 %963
        %v967 = vadd.f32 %v944, %v962
        %v968 = vadd.f32 %v945, %v964
        %v969 = vrcp.pop %v936
        %v970 = vrcp.pop %v937
        %972 = vset.pattern.permute.xlu0 0
        %973 = vperm.xlu0 %972, %v969
        %v974 = vpop.permute.xlu0 %973
        %977 = vset.pattern.permute.xlu0 0
        %978 = vperm.xlu0 %977, %v970
        %v979 = vpop.permute.xlu0 %978
        %v981 = vmul.f32 %v932, %v974
        %v982 = vmul.f32 %v933, %v979
        %v983 = vpack.c.bf16 %v981, %v981
        %v984 = vpack.c.bf16 %v982, %v982
        %985 = vst [vmem:[%s355 + $0xc] sm:$0xf] %v983
        %986 = vst [vmem:[%s355 + $0x1c] sm:$0xf] %v984
        %989 = vrot.lane.b32.xlu0 %v936, 64
        %v990 = vpop.permute.xlu0 %989
        %991 = vrot.lane.b32.xlu0 %v937, 64
        %v992 = vpop.permute.xlu0 %991
        %v995 = vrcp.pop %v990
        %v996 = vmul.f32 %v990, %v995
        %v997 = vsub.f32 1.0, %v996
        %v998 = vmul.f32 %v995, %v997
        %v999 = vadd.f32 %v995, %v998
        %vm1000 = vweird.f32 %v990
        %vm1001 = vweird.f32 %v995
        %vm1002 = vmor %vm1000, %vm1001
        %v1003 = vsel %vm1002, %v995, %v999
        %v1004 = vand.u32 2147483647, %v990
        %vm1005 = vcmp.eq.f32.partialorder %v1004, 8.507059e+37
        %v1006 = vand.u32 %v990, 2147483648
        %v1007 = vor.u32 1.1754944e-38, %v1006
        %v1008 = vsel %vm1005, %v1007, %v1003
        %v1009 = vmul.f32 %v967, %v1008
        %v1010 = vrcp.pop %v992
        %v1011 = vmul.f32 %v992, %v1010
        %v1012 = vsub.f32 1.0, %v1011
        %v1013 = vmul.f32 %v1010, %v1012
        %v1014 = vadd.f32 %v1010, %v1013
        %vm1015 = vweird.f32 %v992
        %vm1016 = vweird.f32 %v1010
        %vm1017 = vmor %vm1015, %vm1016
        %v1018 = vsel %vm1017, %v1010, %v1014
        %v1019 = vand.u32 2147483647, %v992
        %vm1020 = vcmp.eq.f32.partialorder %v1019, 8.507059e+37
        %v1021 = vand.u32 %v992, 2147483648
        %v1022 = vor.u32 1.1754944e-38, %v1021
        %v1023 = vsel %vm1020, %v1022, %v1018
        %v1024 = vmul.f32 %v968, %v1023
        %1025 = vrot.lane.b32.xlu0 %v448, 64
        %v1026 = vpop.permute.xlu0 %1025
        %1027 = vrot.lane.b32.xlu0 %v450, 64
        %v1028 = vpop.permute.xlu0 %1027
        %1033 = vrot.lane.b32.xlu0 %v661, 65
        %v1034 = vpop.permute.xlu0 %1033
        %1035 = vrot.lane.b32.xlu0 %v676, 65
        %v1036 = vpop.permute.xlu0 %1035
        %1041 = vrot.lane.b32.xlu0 %v835, 66
        %v1042 = vpop.permute.xlu0 %1041
        %1043 = vrot.lane.b32.xlu0 %v850, 66
        %v1044 = vpop.permute.xlu0 %1043
        %1049 = vrot.lane.b32.xlu0 %v1009, 67
        %v1050 = vpop.permute.xlu0 %1049
        %1051 = vrot.lane.b32.xlu0 %v1024, 67
        %v1052 = vpop.permute.xlu0 %1051
        %vm1055 = vcmask 7168
        %v1056 = vsel %vm1055, %v1026, %v1034
        %v1057 = vsel %vm1055, %v1028, %v1036
        %vm1058 = vcmask 15360
        %v1059 = vsel %vm1058, %v1056, %v1042
        %v1060 = vsel %vm1058, %v1057, %v1044
        %vm1061 = vcmask 23552
        %v1062 = vsel %vm1061, %v1059, %v1050
        %v1063 = vsel %vm1061, %v1060, %v1052
        %v1064 = vld [vmem:[#allocation5] sm:$0x1]
        %v1066 = vperm.slane %v1064, 0
        %1067 = vset.pattern.permute.xlu0 0
        %1068 = vperm.xlu0 %1067, %v1066
        %v1069 = vpop.permute.xlu0 %1068
        %v1071 = vadd.f32 %v1062, %v1069
        %v1072 = vadd.f32 %v1063, %v1069
        %1073 = vxpose.xlu0.b32.start [1/16] %v1071, 128
        %1074 = vxpose.xlu0.b32.cont [2/16] %v1072, 128
        %1075 = vxpose.xlu0.b32.cont [3/16] 0.0, 128
        %1076 = vxpose.xlu0.b32.cont [4/16] 0.0, 128
        %1077 = vxpose.xlu0.b32.cont [5/16] 0.0, 128
        %1078 = vxpose.xlu0.b32.cont [6/16] 0.0, 128
        %1079 = vxpose.xlu0.b32.cont [7/16] 0.0, 128
        %1080 = vxpose.xlu0.b32.cont [8/16] 0.0, 128
        %1081 = vxpose.xlu0.b32.cont [9/16] 0.0, 128
        %1082 = vxpose.xlu0.b32.cont [10/16] 0.0, 128
        %1083 = vxpose.xlu0.b32.cont [11/16] 0.0, 128
        %1084 = vxpose.xlu0.b32.cont [12/16] 0.0, 128
        %1085 = vxpose.xlu0.b32.cont [13/16] 0.0, 128
        %1086 = vxpose.xlu0.b32.cont [14/16] 0.0, 128
        %1087 = vxpose.xlu0.b32.cont [15/16] 0.0, 128
        %1088 = vxpose.xlu0.b32.end [16/16] 0.0, 128
        %v1089 = vpop.trf.xlu0
        %v1090 = vpop.trf.xlu0
        %v1091 = vpop.trf.xlu0
        %v1092 = vpop.trf.xlu0
        %v1093 = vpop.trf.xlu0
        %v1094 = vpop.trf.xlu0
        %v1095 = vpop.trf.xlu0
        %v1096 = vpop.trf.xlu0
        %v1097 = vpop.trf.xlu0
        %v1098 = vpop.trf.xlu0
        %v1099 = vpop.trf.xlu0
        %v1100 = vpop.trf.xlu0
        %v1101 = vpop.trf.xlu0
        %v1102 = vpop.trf.xlu0
        %v1103 = vpop.trf.xlu0
        %v1104 = vpop.trf.xlu0
        %vm1105 = vcmask 125952
        %1106 = vst.msk [vmem:[%s348] sm:$0xf] %vm1105, %v1089
        %s1107 = sand.u32 %s195, 1
        %s1108 = scalar_lea.sflag [#allocation8], %s1107
        %s1109 = sand.u32 %s195, 1
        %s1110 = smul.addr %s1109, 4
        %s1111 = scalar_lea.vmem [#allocation11], %s1110
        %s1112 = sand.u32 %s223, 1
        %s1113 = scalar_lea.sflag [#allocation13], %s1112
        %s1114 = sand.u32 %s223, 1
        %s1115 = smul.addr %s1114, 32
        %s1116 = scalar_lea.vmem [#allocation12], %s1115
        // Predicated region
        $region53: #{tpu_custom_call.1} parent=43 // pred_check
          %p1117 = pneg %p205
        $region54: #{tpu_custom_call.1} parent=43 // pred_check_branch
          %1119 = sbr.rel (%p1117) target = $region56
        $region55: #{tpu_custom_call.1} parent=43 // pred_region
          %1121 = vsyncadd %s1108, 0
          %s1122 = sadd.s32 %s47, %s46
          %s1123 = smul.addr %s1122, 4
          %s1124 = scalar_lea.hbm %s7, %s1123
          %s1126 = sshll.u32 %s1111, 4
          %s1127 = int_to_ptr.vmem [resolvable:$true] %s1126
          %s1128 = sshll.u32 %s1124, 4
          %s1129 = int_to_ptr.hbm [resolvable:$true] %s1128
          %1131 = dma.vmem_to_hbm [thread:$0]  %s1127, 64, %s1129, %s1108
        $region56: #{tpu_custom_call.1} parent=43 // pred_fallthru
          _
        // Predicated region
        $region57: #{tpu_custom_call.1} parent=43 // pred_check
          %p1132 = pneg %p233
        $region58: #{tpu_custom_call.1} parent=43 // pred_check_branch
          %1134 = sbr.rel (%p1132) target = $region60
        $region59: #{tpu_custom_call.1} parent=43 // pred_region
          %s1135 = smul.u32 2, %s47
          %1137 = vsyncadd %s1113, 0
          %s1138 = smul.addr %s1135, 4
          %s1139 = smul.addr %s46, 8
          %s1140 = sadd.s32 %s1138, %s1139
          %s1141 = smul.addr %s1140, 4
          %s1142 = scalar_lea.hbm %s8, %s1141
          %s1143 = sshll.u32 %s1116, 4
          %s1144 = int_to_ptr.vmem [resolvable:$true] %s1143
          %s1145 = sshll.u32 %s1142, 4
          %s1146 = int_to_ptr.hbm [resolvable:$true] %s1145
          %1151 = dma.vmem_to_hbm [thread:$0]  %s1144, 512, %s1146, %s1113, 256, 256, 16
        $region60: #{tpu_custom_call.1} parent=43 // pred_fallthru
          _
      $region44: #{tpu_custom_call.1} parent=5 // pred_fallthru
        _
      %p1152 = scmp.le.s32.totalorder 2, %s37
      // Predicated region
      $region61: #{tpu_custom_call.1} parent=5 // pred_check
        %p1153 = pneg %p1152
      $region62: #{tpu_custom_call.1} parent=5 // pred_check_branch
        %1155 = sbr.rel (%p1153) target = $region64
      $region63: #{tpu_custom_call.1} parent=5 // pred_region
        %s1156 = ssub.s32 %s37, 2
        // Predicated region
        $region65: #{tpu_custom_call.1} parent=63 // pred_check
          %p1157 = pneg %p211
        $region66: #{tpu_custom_call.1} parent=63 // pred_check_branch
          %1159 = sbr.rel (%p1157) target = $region68
        $region67: #{tpu_custom_call.1} parent=63 // pred_region
          %s1160 = sand.u32 %s196, 1
          %s1161 = scalar_lea.sflag [#allocation8], %s1160
          %s1162 = sand.u32 %s196, 1
          %s1163 = smul.addr %s1162, 4
          %s1164 = scalar_lea.vmem [#allocation11], %s1163
          %1166 = dma.done %s1161, 64
        $region68: #{tpu_custom_call.1} parent=63 // pred_fallthru
          _
        // Predicated region
        $region69: #{tpu_custom_call.1} parent=63 // pred_check
          %p1167 = pneg %p239
        $region70: #{tpu_custom_call.1} parent=63 // pred_check_branch
          %1169 = sbr.rel (%p1167) target = $region72
        $region71: #{tpu_custom_call.1} parent=63 // pred_region
          %s1170 = sand.u32 %s224, 1
          %s1171 = scalar_lea.sflag [#allocation13], %s1170
          %s1172 = sand.u32 %s224, 1
          %s1173 = smul.addr %s1172, 32
          %s1174 = scalar_lea.vmem [#allocation12], %s1173
          %1176 = dma.done %s1171, 512
        $region72: #{tpu_custom_call.1} parent=63 // pred_fallthru
          _
      $region64: #{tpu_custom_call.1} parent=5 // pred_fallthru
        _
    $region6: #{tpu_custom_call.1} parent=1 // loop_footer
      %s41 = sadd.s32 1, %s37
    $region7: #{tpu_custom_call.1} parent=1 // loop_footer_branch
      %36 = sbr.rel target = $region3
    $region8: #{tpu_custom_call.1} parent=1 // loop_exit
      _
    %1177 = vsyncpa [#allocation7], 1
    %s1178 = scalar_lea.sflag [#allocation7], 1
    %1179 = vsyncpa %s1178, 1
    %1180 = vsyncpa [#allocation10], 1
    %1181 = vsyncpa [#allocation8], 1
    %s1182 = scalar_lea.sflag [#allocation8], 1
    %1183 = vsyncpa %s1182, 1
    %1184 = vsyncpa [#allocation13], 1
    %s1185 = scalar_lea.sflag [#allocation13], 1
    %1186 = vsyncpa %s1185, 1

</llo_original>
